<compile_context>
chip_gen: v6e
topology: v6e:2x2x1
jax: 0.10.0
libtpu: 0.0.40
codegen_flags: <defaults>
</compile_context>

<pallas_src>
import functools

import jax
import jax.numpy as jnp
from jax import lax
from jax.experimental import pallas as pl
from jax.experimental.pallas import tpu as pltpu

BN_EPS = 1e-5


def _round_up(a, b):
    return ((a + b - 1) // b) * b


def _conv_stats_kernel(wt_ref, pt_ref, y_ref, sum_ref, sq_ref):
    """Pass 1: conv-as-matmul (lane-dense) + per-channel sum / sum-of-squares.

    wt_ref:  [Cout, K]   bf16 (resident across the M grid)
    pt_ref:  [K, TM]     bf16 (one M tile of transposed im2col patches)
    y_ref:   [Cout, TM]  f32  (conv output tile, lane-dense)
    sum_ref: [Cout, 1]   f32  (resident accumulator: sum over M)
    sq_ref:  [Cout, 1]   f32  (resident accumulator: sum of squares over M)
    """
    i = pl.program_id(0)

    @pl.when(i == 0)
    def _():
        sum_ref[...] = jnp.zeros_like(sum_ref)
        sq_ref[...] = jnp.zeros_like(sq_ref)

    # MXU matmul, f32 accumulation.
    y = jnp.dot(wt_ref[...], pt_ref[...], preferred_element_type=jnp.float32)
    y_ref[...] = y

    # Per-channel partial stats: cheap lane (XLU) reduction over the M tile.
    sum_ref[...] += jnp.sum(y, axis=1, keepdims=True)
    sq_ref[...] += jnp.sum(y * y, axis=1, keepdims=True)


def _bn_relu_kernel(y_ref, scale_ref, shift_ref, out_ref, *, relu):
    """Pass 2: out = y * scale + shift (gamma/beta/mean/var folded), then ReLU.

    y_ref: [Cout, TM] f32; scale/shift: [Cout, 1] f32; out_ref: [Cout, TM] f32.
    """
    out = y_ref[...] * scale_ref[...] + shift_ref[...]
    if relu:
        out = jnp.maximum(out, 0.0)
    out_ref[...] = out


def _im2col_nchw_t(x, kernel, stride, padding):
    """x: [N, Cin, H, W] -> transposed patches [Cin*k*k, N*Ho*Wo].

    K index is (cin major, then kh, then kw), matching
    torch weight.reshape(Cout, Cin*k*k). M index is (n, ho, wo) row-major.
    """
    n, c, h, w = x.shape
    xp = jnp.pad(x, ((0, 0), (0, 0), (padding, padding), (padding, padding)))
    ho = (h + 2 * padding - kernel) // stride + 1
    wo = (w + 2 * padding - kernel) // stride + 1
    cols = []
    for i in range(kernel):
        for j in range(kernel):
            cols.append(xp[:, :, i:i + stride * ho:stride, j:j + stride * wo:stride])
    p = jnp.stack(cols, axis=2)            # [N, Cin, k*k, Ho, Wo]
    p = p.transpose(1, 2, 0, 3, 4)         # [Cin, k*k, N, Ho, Wo]
    return p.reshape(c * kernel * kernel, n * ho * wo), ho, wo


def basic_block_forward(x, conv_weight, gamma, beta, *,
                        kernel, stride, padding, relu=True, tm=256):
    """x: [N, Cin, H, W]; conv_weight: [Cout, Cin, k, k]; gamma/beta: [Cout]."""
    n, cin, h, w = x.shape
    cout = conv_weight.shape[0]
    k_dim = cin * kernel * kernel

    patches_t, ho, wo = _im2col_nchw_t(x, kernel, stride, padding)   # [K, M]
    m = n * ho * wo

    # Lane tile: multiple of 128, capped. Per-step VMEM (double-buffered) is
    # ~2*(K*TM*2 + Cout*TM*4) bytes + resident weight; at real ResNet scale pick
    # TM so this stays well under the scoped VMEM limit (32 MiB default, v7x
    # has only 64 MiB physical).
    tm_eff = _round_up(max(128, min(tm, _round_up(m, 128))), 128)
    m_pad = _round_up(m, tm_eff)
    if m_pad != m:
        # Zero-padded patch columns produce zero conv outputs, so they add
        # nothing to sum / sum-of-squares; we still divide by the true M.
        patches_t = jnp.pad(patches_t, ((0, 0), (0, m_pad - m)))
    grid_m = m_pad // tm_eff

    wt = conv_weight.reshape(cout, k_dim)
    patches_bf16 = patches_t.astype(jnp.bfloat16)
    wt_bf16 = wt.astype(jnp.bfloat16)

    # ---- Pass 1: conv + stats (reduction axis over M -> "arbitrary") ----
    cost1 = pl.CostEstimate(
        flops=2 * cout * k_dim * m_pad + 3 * cout * m_pad,
        transcendentals=0,
        bytes_accessed=(patches_bf16.size * 2 + wt_bf16.size * 2
                        + cout * m_pad * 4 + 2 * cout * 4),
    )
    y_t, csum, csq = pl.pallas_call(
        _conv_stats_kernel,
        out_shape=(
            jax.ShapeDtypeStruct((cout, m_pad), jnp.float32),
            jax.ShapeDtypeStruct((cout, 1), jnp.float32),
            jax.ShapeDtypeStruct((cout, 1), jnp.float32),
        ),
        grid=(grid_m,),
        in_specs=[
            pl.BlockSpec((cout, k_dim), lambda i: (0, 0)),
            pl.BlockSpec((k_dim, tm_eff), lambda i: (0, i)),
        ],
        out_specs=(
            pl.BlockSpec((cout, tm_eff), lambda i: (0, i)),
            pl.BlockSpec((cout, 1), lambda i: (0, 0)),
            pl.BlockSpec((cout, 1), lambda i: (0, 0)),
        ),
        compiler_params=pltpu.CompilerParams(
            dimension_semantics=("arbitrary",)),
        cost_estimate=cost1,
    )(wt_bf16, patches_bf16)

    # ---- Fold BN batch stats + gamma/beta into one per-channel scale/shift ----
    # (training-mode BN: batch mean, biased variance over N*Ho*Wo; f32 stats).
    g32 = gamma.astype(jnp.float32)
    b32 = beta.astype(jnp.float32)
    mean = csum[:, 0] / m
    var = jnp.maximum(csq[:, 0] / m - mean * mean, 0.0)
    inv_std = lax.rsqrt(var + BN_EPS)
    scale = (g32 * inv_std).reshape(cout, 1)
    shift = (b32 - g32 * mean * inv_std).reshape(cout, 1)

    # ---- Pass 2: normalize + ReLU (independent tiles -> "parallel") ----
    cost2 = pl.CostEstimate(
        flops=3 * cout * m_pad,
        transcendentals=0,
        bytes_accessed=2 * cout * m_pad * 4 + 2 * cout * 4,
    )
    out_t = pl.pallas_call(
        functools.partial(_bn_relu_kernel, relu=relu),
        out_shape=jax.ShapeDtypeStruct((cout, m_pad), jnp.float32),
        grid=(grid_m,),
        in_specs=[
            pl.BlockSpec((cout, tm_eff), lambda i: (0, i)),
            pl.BlockSpec((cout, 1), lambda i: (0, 0)),
            pl.BlockSpec((cout, 1), lambda i: (0, 0)),
        ],
        out_specs=pl.BlockSpec((cout, tm_eff), lambda i: (0, i)),
        compiler_params=pltpu.CompilerParams(
            dimension_semantics=("parallel",)),
        cost_estimate=cost2,
    )(y_t, scale, shift)

    # [Cout, M] -> [Cout, N, Ho, Wo] -> NCHW
    return out_t[:, :m].reshape(cout, n, ho, wo).transpose(1, 0, 2, 3)


if __name__ == "__main__":
    # BasicBlock(in_channel=4, out_channel=8, kernel=3, strides=1, padding=1,
    #            bias=False, relu=True)
    N, CIN, H, W = 2, 4, 16, 16
    COUT, KERNEL, STRIDE, PAD = 8, 3, 1, 1

    key = jax.random.PRNGKey(0)
    kx, kw = jax.random.split(key)
    x = jax.random.normal(kx, (N, CIN, H, W), dtype=jnp.float32)
    # Fresh module: BN gamma=1, beta=0.
    conv_weight = jax.random.normal(
        kw, (COUT, CIN, KERNEL, KERNEL), dtype=jnp.float32) * 0.1
    gamma = jnp.ones((COUT,), dtype=jnp.float32)
    beta = jnp.zeros((COUT,), dtype=jnp.float32)

    out = basic_block_forward(x, conv_weight, gamma, beta,
                              kernel=KERNEL, stride=STRIDE, padding=PAD, relu=True)
    jax.block_until_ready(out)
    assert out.shape == (N, COUT, H, W), out.shape

    # Pure-JAX f32 reference (tolerance accounts for bf16 matmul inputs).
    y_ref = lax.conv_general_dilated(
        x, conv_weight, window_strides=(STRIDE, STRIDE),
        padding=((PAD, PAD), (PAD, PAD)),
        dimension_numbers=("NCHW", "OIHW", "NCHW"))
    mu = y_ref.mean(axis=(0, 2, 3), keepdims=True)
    var = y_ref.var(axis=(0, 2, 3), keepdims=True)       # biased, as BN uses
    ref = (gamma.reshape(1, -1, 1, 1) * (y_ref - mu) * lax.rsqrt(var + BN_EPS)
           + beta.reshape(1, -1, 1, 1))
    ref = jnp.maximum(ref, 0.0)
    max_err = float(jnp.max(jnp.abs(out - ref)))
    assert jnp.allclose(out, ref, atol=5e-2, rtol=5e-2), max_err

    print("KERNEL_OK")
</pallas_src>

<mosaic_0001>
module attributes {stable_mosaic.version = 11 : i64} {
  func.func @_conv_stats_kernel(%arg0: i32, %arg1: memref<8x36xbf16, #tpu.memory_space<vmem>>, %arg2: memref<36x256xbf16, #tpu.memory_space<vmem>>, %arg3: memref<8x256xf32, #tpu.memory_space<vmem>>, %arg4: memref<8x1xf32, #tpu.memory_space<vmem>>, %arg5: memref<8x1xf32, #tpu.memory_space<vmem>>) attributes {dimension_semantics = [#tpu.dimension_semantics<arbitrary>], iteration_bounds = array<i64: 2>, scalar_prefetch = 0 : i64, scratch_operands = 0 : i64, tpu.core_type = #tpu.core_type<tc>, window_params = [{pipeline_mode = #tpu.pipeline_mode<synchronous>, transform_indices = @transform_0, window_bounds = array<i64: 8, 36>}, {transform_indices = @transform_1, window_bounds = array<i64: 36, 256>}, {transform_indices = @transform_2, window_bounds = array<i64: 8, 256>}, {pipeline_mode = #tpu.pipeline_mode<synchronous>, transform_indices = @transform_3, window_bounds = array<i64: 8, 1>}, {pipeline_mode = #tpu.pipeline_mode<synchronous>, transform_indices = @transform_4, window_bounds = array<i64: 8, 1>}]} {
    %c0_i32 = arith.constant 0 : i32
    %0 = arith.cmpi eq, %arg0, %c0_i32 : i32
    %1 = arith.extui %0 : i1 to i32
    %c0_i32_0 = arith.constant 0 : i32
    %2 = arith.cmpi ne, %1, %c0_i32_0 : i32
    scf.if %2 {
      %cst_16 = arith.constant 0.000000e+00 : f32
      %18 = vector.broadcast %cst_16 : f32 to vector<8x1xf32>
      %c0_17 = arith.constant 0 : index
      %c0_18 = arith.constant 0 : index
      %19 = vector.load %arg4[%c0_17, %c0_18] : memref<8x1xf32, #tpu.memory_space<vmem>>, vector<8x1xf32>
      tpu.vector_store %arg4[%c0_17, %c0_18], %18 {strides = array<i32>} : memref<8x1xf32, #tpu.memory_space<vmem>>, vector<8x1xf32>,
      %cst_19 = arith.constant 0.000000e+00 : f32
      %20 = vector.broadcast %cst_19 : f32 to vector<8x1xf32>
      %c0_20 = arith.constant 0 : index
      %c0_21 = arith.constant 0 : index
      %21 = vector.load %arg5[%c0_20, %c0_21] : memref<8x1xf32, #tpu.memory_space<vmem>>, vector<8x1xf32>
      tpu.vector_store %arg5[%c0_20, %c0_21], %20 {strides = array<i32>} : memref<8x1xf32, #tpu.memory_space<vmem>>, vector<8x1xf32>,
    } else {
    }
    %c0 = arith.constant 0 : index
    %c0_1 = arith.constant 0 : index
    %3 = vector.load %arg1[%c0, %c0_1] : memref<8x36xbf16, #tpu.memory_space<vmem>>, vector<8x36xbf16>
    %c0_2 = arith.constant 0 : index
    %c0_3 = arith.constant 0 : index
    %4 = vector.load %arg2[%c0_2, %c0_3] : memref<36x256xbf16, #tpu.memory_space<vmem>>, vector<36x256xbf16>
    %cst = arith.constant dense<0.000000e+00> : vector<8x256xf32>
    %5 = tpu.matmul %3, %4, %cst {dimension_numbers = #tpu.dot_dimension_numbers<[1], [0], [0], [1], [0, 0, 1, 1], [], []>} : vector<8x36xbf16>, vector<36x256xbf16>, vector<8x256xf32> -> vector<8x256xf32>
    %c0_4 = arith.constant 0 : index
    %c0_5 = arith.constant 0 : index
    %6 = vector.load %arg3[%c0_4, %c0_5] : memref<8x256xf32, #tpu.memory_space<vmem>>, vector<8x256xf32>
    tpu.vector_store %arg3[%c0_4, %c0_5], %5 {strides = array<i32>} : memref<8x256xf32, #tpu.memory_space<vmem>>, vector<8x256xf32>,
    %c0_6 = arith.constant 0 : index
    %c0_7 = arith.constant 0 : index
    %7 = vector.load %arg4[%c0_6, %c0_7] : memref<8x1xf32, #tpu.memory_space<vmem>>, vector<8x1xf32>
    %cst_8 = arith.constant dense<0.000000e+00> : vector<8xf32>
    %8 = vector.multi_reduction <add>, %5, %cst_8 [1] : vector<8x256xf32> to vector<8xf32>
    %9 = vector.shape_cast %8 : vector<8xf32> to vector<8x1xf32>
    %10 = arith.addf %7, %9 : vector<8x1xf32>
    %c0_9 = arith.constant 0 : index
    %c0_10 = arith.constant 0 : index
    %11 = vector.load %arg4[%c0_9, %c0_10] : memref<8x1xf32, #tpu.memory_space<vmem>>, vector<8x1xf32>
    tpu.vector_store %arg4[%c0_9, %c0_10], %10 {strides = array<i32>} : memref<8x1xf32, #tpu.memory_space<vmem>>, vector<8x1xf32>,
    %c0_11 = arith.constant 0 : index
    %c0_12 = arith.constant 0 : index
    %12 = vector.load %arg5[%c0_11, %c0_12] : memref<8x1xf32, #tpu.memory_space<vmem>>, vector<8x1xf32>
    %13 = arith.mulf %5, %5 : vector<8x256xf32>
    %cst_13 = arith.constant dense<0.000000e+00> : vector<8xf32>
    %14 = vector.multi_reduction <add>, %13, %cst_13 [1] : vector<8x256xf32> to vector<8xf32>
    %15 = vector.shape_cast %14 : vector<8xf32> to vector<8x1xf32>
    %16 = arith.addf %12, %15 : vector<8x1xf32>
    %c0_14 = arith.constant 0 : index
    %c0_15 = arith.constant 0 : index
    %17 = vector.load %arg5[%c0_14, %c0_15] : memref<8x1xf32, #tpu.memory_space<vmem>>, vector<8x1xf32>
    tpu.vector_store %arg5[%c0_14, %c0_15], %16 {strides = array<i32>} : memref<8x1xf32, #tpu.memory_space<vmem>>, vector<8x1xf32>,
    return
  }
  func.func @transform_0(%arg0: i32) -> (i32, i32) {
    %c0_i32 = arith.constant 0 : i32
    %c0_i32_0 = arith.constant 0 : i32
    %c0_i32_1 = arith.constant 0 : i32
    return %c0_i32, %c0_i32_0 : i32, i32
  }
  func.func @transform_1(%arg0: i32) -> (i32, i32) {
    %c0_i32 = arith.constant 0 : i32
    %c0_i32_0 = arith.constant 0 : i32
    return %c0_i32, %arg0 : i32, i32
  }
  func.func @transform_2(%arg0: i32) -> (i32, i32) {
    %c0_i32 = arith.constant 0 : i32
    %c0_i32_0 = arith.constant 0 : i32
    return %c0_i32, %arg0 : i32, i32
  }
  func.func @transform_3(%arg0: i32) -> (i32, i32) {
    %c0_i32 = arith.constant 0 : i32
    %c0_i32_0 = arith.constant 0 : i32
    %c0_i32_1 = arith.constant 0 : i32
    return %c0_i32, %c0_i32_0 : i32, i32
  }
  func.func @transform_4(%arg0: i32) -> (i32, i32) {
    %c0_i32 = arith.constant 0 : i32
    %c0_i32_0 = arith.constant 0 : i32
    %c0_i32_1 = arith.constant 0 : i32
    return %c0_i32, %c0_i32_0 : i32, i32
  }
}

</mosaic_0001>

<llo_original>
// kernel: tpu_custom_call.1
$region0: #{tpu_custom_call.1}
  #allocation0 [shape = 'u32[]', space=smem, size = 0x4, offset = 0x4, fixed_abs, tag = 'smem constant byte address 0x4 - core index']
  #allocation1 [shape = 'u32[144,128]{1,0:T(1,128)}', space=vmem, size = 0x12000, scoped, tag = 'internal scratch']
  %s0 = inlined_call_operand.hbm [shape: bf16[8,36], index: 0, kind: input, shape index: {}]
  %s1 = inlined_call_operand.hbm [shape: bf16[36,512], index: 1, kind: input, shape index: {}]
  %s2 = inlined_call_operand.hbm [shape: f32[8,512], index: 2, kind: output, shape index: {0}]
  %s3 = inlined_call_operand.vmem [shape: f32[8,1], index: 3, kind: output, shape index: {1}]
  %s4 = inlined_call_operand.vmem [shape: f32[8,1], index: 4, kind: output, shape index: {2}]
  %5 = xla_tuple %s2, %s3, %s4
  %s6 = sld [smem:[#allocation0]]
  $region69: #{tpu_custom_call.1} parent=0
    _
  %s8 = ssub.s32 1, %s6
  %s9 = scalar_select 0, %s8, %s6
  $region1: #{tpu_custom_call.1} parent=0
    #allocation2 [shape = 'u8[2048]{0}', space=vmem, size = 0x800, scoped, tag = 'input window, operand 0, single buffered']
    #allocation3 [shape = 's32[2]{0}', space=sflag, size = 0x8, scoped, tag = 'scoped memory for tpu_custom_call.1']
    #allocation4 [shape = 's32[2]{0}', space=sflag, size = 0x8, scoped, tag = 'scoped memory for tpu_custom_call.1']
    #allocation5 [shape = 'u8[40960]{0}', space=vmem, size = 0xa000, scoped, tag = 'input window, operand 1']
    #allocation6 [shape = 's32[2]{0}', space=sflag, size = 0x8, scoped, tag = 'scoped memory for tpu_custom_call.1']
    #allocation7 [shape = 'u8[16384]{0}', space=vmem, size = 0x4000, scoped, tag = 'output window, operand 0']
    %10 = vsyncpa [#allocation3], 0
    %11 = vsyncpa [#allocation6], 0
    %s12 = scalar_lea.sflag [#allocation6], 1
    %13 = vsyncpa %s12, 0
    %14 = vsyncpa [#allocation4], 0
    %s15 = scalar_lea.sflag [#allocation4], 1
    %16 = vsyncpa %s15, 0
    loop: start=0, step=1, limit=4
    $region2: #{tpu_custom_call.1} parent=1 // loop_pre_header
      _
    $region3: #{tpu_custom_call.1} parent=1 // loop_header
      %s18 = sphi 0, %s22
      %p19 = scmp.ge.s32.totalorder %s18, 4
      %s26 = sphi 0, %s26
      %s28 = sphi 0, %s26
      %s29 = sphi 0, %s28
      %s43 = sphi 0, %s29
      %s49 = sphi 0, %s51
      %s52 = sphi 0, %s49
      %s53 = sphi 0, %s52
      %s69 = sphi 0, %s53
      %s75 = sphi 0, %s77
      %s78 = sphi 0, %s75
      %s79 = sphi 0, %s78
      %s95 = sphi 0, %s79
      %s99 = sphi 0, %s99
      %s101 = sphi 0, %s99
      %s102 = sphi 0, %s101
      %s116 = sphi 0, %s102
      %s120 = sphi 0, %s120
      %s122 = sphi 0, %s120
      %s123 = sphi 0, %s122
      %s137 = sphi 0, %s123
    $region4: #{tpu_custom_call.1} parent=1 // loop_header_branch
      %21 = sbr.rel (%p19) target = $region8
    $region5: #{tpu_custom_call.1} parent=1 // loop_body
      %s23 = ssub.s32 %s18, 1
      %s24 = ssub.s32 %s18, 2
      %s25 = sadd.s32 %s18, 1
      %s27 = sadd.s32 %s26, 1
      %p30 = scmp.eq.s32.totalorder %s18, 1
      %p31 = scmp.ne.s32.totalorder %s26, %s28
      %p32 = scmp.eq.s32.totalorder %s18, 0
      %p33 = por %p31, %p32
      %p34 = scmp.ne.s32.totalorder %s26, %s28
      %p35 = scmp.eq.s32.totalorder %s23, 1
      %p36 = por %p34, %p35
      %p37 = scmp.ne.s32.totalorder %s28, %s29
      %p38 = scmp.eq.s32.totalorder %s23, 0
      %p39 = por %p37, %p38
      %p40 = scmp.ne.s32.totalorder %s28, %s29
      %p41 = scmp.eq.s32.totalorder %s24, 1
      %p42 = por %p40, %p41
      %p44 = scmp.ne.s32.totalorder %s29, %s43
      %p45 = scmp.eq.s32.totalorder %s24, 0
      %p46 = por %p44, %p45
      %s47 = ssub.s32 %s18, %s25
      %p48 = scmp.eq.s32.totalorder %s47, 0
      %s50 = sadd.s32 %s49, 1
      %s51 = scalar_select %p48, %s49, %s50
      %p54 = pneg %p48
      %p55 = scmp.eq.s32.totalorder %s18, 1
      %p56 = por %p54, %p55
      %p57 = scmp.ne.s32.totalorder %s49, %s52
      %p58 = scmp.eq.s32.totalorder %s18, 0
      %p59 = por %p57, %p58
      %p60 = scmp.ne.s32.totalorder %s49, %s52
      %p61 = scmp.eq.s32.totalorder %s23, 1
      %p62 = por %p60, %p61
      %p63 = scmp.ne.s32.totalorder %s52, %s53
      %p64 = scmp.eq.s32.totalorder %s23, 0
      %p65 = por %p63, %p64
      %p66 = scmp.ne.s32.totalorder %s52, %s53
      %p67 = scmp.eq.s32.totalorder %s24, 1
      %p68 = por %p66, %p67
      %p70 = scmp.ne.s32.totalorder %s53, %s69
      %p71 = scmp.eq.s32.totalorder %s24, 0
      %p72 = por %p70, %p71
      %s73 = ssub.s32 %s18, %s25
      %p74 = scmp.eq.s32.totalorder %s73, 0
      %s76 = sadd.s32 %s75, 1
      %s77 = scalar_select %p74, %s75, %s76
      %p80 = pneg %p74
      %p81 = scmp.eq.s32.totalorder %s18, 1
      %p82 = por %p80, %p81
      %p83 = scmp.ne.s32.totalorder %s75, %s78
      %p84 = scmp.eq.s32.totalorder %s18, 0
      %p85 = por %p83, %p84
      %p86 = scmp.ne.s32.totalorder %s75, %s78
      %p87 = scmp.eq.s32.totalorder %s23, 1
      %p88 = por %p86, %p87
      %p89 = scmp.ne.s32.totalorder %s78, %s79
      %p90 = scmp.eq.s32.totalorder %s23, 0
      %p91 = por %p89, %p90
      %p92 = scmp.ne.s32.totalorder %s78, %s79
      %p93 = scmp.eq.s32.totalorder %s24, 1
      %p94 = por %p92, %p93
      %p96 = scmp.ne.s32.totalorder %s79, %s95
      %p97 = scmp.eq.s32.totalorder %s24, 0
      %p98 = por %p96, %p97
      %s100 = sadd.s32 %s99, 1
      %p103 = scmp.eq.s32.totalorder %s18, 1
      %p104 = scmp.ne.s32.totalorder %s99, %s101
      %p105 = scmp.eq.s32.totalorder %s18, 0
      %p106 = por %p104, %p105
      %p107 = scmp.ne.s32.totalorder %s99, %s101
      %p108 = scmp.eq.s32.totalorder %s23, 1
      %p109 = por %p107, %p108
      %p110 = scmp.ne.s32.totalorder %s101, %s102
      %p111 = scmp.eq.s32.totalorder %s23, 0
      %p112 = por %p110, %p111
      %p113 = scmp.ne.s32.totalorder %s101, %s102
      %p114 = scmp.eq.s32.totalorder %s24, 1
      %p115 = por %p113, %p114
      %p117 = scmp.ne.s32.totalorder %s102, %s116
      %p118 = scmp.eq.s32.totalorder %s24, 0
      %p119 = por %p117, %p118
      %s121 = sadd.s32 %s120, 1
      %p124 = scmp.eq.s32.totalorder %s18, 1
      %p125 = scmp.ne.s32.totalorder %s120, %s122
      %p126 = scmp.eq.s32.totalorder %s18, 0
      %p127 = por %p125, %p126
      %p128 = scmp.ne.s32.totalorder %s120, %s122
      %p129 = scmp.eq.s32.totalorder %s23, 1
      %p130 = por %p128, %p129
      %p131 = scmp.ne.s32.totalorder %s122, %s123
      %p132 = scmp.eq.s32.totalorder %s23, 0
      %p133 = por %p131, %p132
      %p134 = scmp.ne.s32.totalorder %s122, %s123
      %p135 = scmp.eq.s32.totalorder %s24, 1
      %p136 = por %p134, %p135
      %p138 = scmp.ne.s32.totalorder %s123, %s137
      %p139 = scmp.eq.s32.totalorder %s24, 0
      %p140 = por %p138, %p139
      %p141 = scmp.le.s32.totalorder 1, %s18
      %p142 = scmp.lt.s32.totalorder %s18, 3
      %p143 = pnand %p141, %p142
      %p144 = pneg %p143
      // Predicated region
      $region9: #{tpu_custom_call.1} parent=5 // pred_check
        _
      $region10: #{tpu_custom_call.1} parent=5 // pred_check_branch
        %146 = sbr.rel (%p143) target = $region12
      $region11: #{tpu_custom_call.1} parent=5 // pred_region
        %s147 = ssub.s32 %s18, 1
        // Predicated region
        $region13: #{tpu_custom_call.1} parent=11 // pred_check
          %p148 = pneg %p39
        $region14: #{tpu_custom_call.1} parent=11 // pred_check_branch
          %150 = sbr.rel (%p148) target = $region16
        $region15: #{tpu_custom_call.1} parent=11 // pred_region
          %s152 = ssub.s32 64, 64
          %153 = vsyncadd [#allocation3], %s152
          %s155 = sshll.u32 [#allocation2], 4
          %s156 = int_to_ptr.vmem [resolvable:$true] %s155
          %158 = dma.hbm_to_vmem [thread:$0]  %s0, 64, %s156, [#allocation3]
        $region16: #{tpu_custom_call.1} parent=11 // pred_fallthru
          _
      $region12: #{tpu_custom_call.1} parent=5 // pred_fallthru
        _
      %p159 = scmp.lt.s32.totalorder %s18, 2
      // Predicated region
      $region17: #{tpu_custom_call.1} parent=5 // pred_check
        %p160 = pneg %p159
      $region18: #{tpu_custom_call.1} parent=5 // pred_check_branch
        %162 = sbr.rel (%p160) target = $region20
      $region19: #{tpu_custom_call.1} parent=5 // pred_region
        // Predicated region
        $region21: #{tpu_custom_call.1} parent=19 // pred_check
          %p163 = pneg %p59
        $region22: #{tpu_custom_call.1} parent=19 // pred_check_branch
          %165 = sbr.rel (%p163) target = $region24
        $region23: #{tpu_custom_call.1} parent=19 // pred_region
          %s166 = sand.u32 %s49, 1
          %s167 = scalar_lea.sflag [#allocation6], %s166
          %s168 = sand.u32 %s49, 1
          %s169 = smul.addr %s168, 40
          %s170 = scalar_lea.vmem [#allocation5], %s169
          %s171 = smul.u32 2, %s18
          %s173 = ssub.s32 640, 640
          %174 = vsyncadd %s167, %s173
          %s175 = smul.addr %s171, 64
          %s176 = scalar_lea.hbm %s1, %s175
          %s177 = sshll.u32 %s170, 4
          %s178 = int_to_ptr.vmem [resolvable:$true] %s177
          %183 = dma.hbm_to_vmem [thread:$0]  %s176, 640, %s178, %s167, 256, 128, 8
        $region24: #{tpu_custom_call.1} parent=19 // pred_fallthru
          _
      $region20: #{tpu_custom_call.1} parent=5 // pred_fallthru
        _
      %p184 = scmp.le.s32.totalorder 1, %s18
      %p185 = scmp.lt.s32.totalorder %s18, 3
      %p186 = pnand %p184, %p185
      %p187 = pneg %p186
      // Predicated region
      $region25: #{tpu_custom_call.1} parent=5 // pred_check
        _
      $region26: #{tpu_custom_call.1} parent=5 // pred_check_branch
        %189 = sbr.rel (%p186) target = $region28
      $region27: #{tpu_custom_call.1} parent=5 // pred_region
        %s190 = ssub.s32 %s18, 1
        // Predicated region
        $region29: #{tpu_custom_call.1} parent=27 // pred_check
          %p191 = pneg %p39
        $region30: #{tpu_custom_call.1} parent=27 // pred_check_branch
          %193 = sbr.rel (%p191) target = $region32
        $region31: #{tpu_custom_call.1} parent=27 // pred_region
          %194 = dma.done [#allocation3], 64
        $region32: #{tpu_custom_call.1} parent=27 // pred_fallthru
          _
        %s195 = sand.u32 %s52, 1
        %s196 = scalar_lea.sflag [#allocation6], %s195
        %s197 = sand.u32 %s52, 1
        %s198 = smul.addr %s197, 40
        %s199 = scalar_lea.vmem [#allocation5], %s198
        // Predicated region
        $region33: #{tpu_custom_call.1} parent=27 // pred_check
          %p200 = pneg %p65
        $region34: #{tpu_custom_call.1} parent=27 // pred_check_branch
          %202 = sbr.rel (%p200) target = $region36
        $region35: #{tpu_custom_call.1} parent=27 // pred_region
          %203 = dma.done %s196, 640
        $region36: #{tpu_custom_call.1} parent=27 // pred_fallthru
          _
        %p204 = pneg %p39
        %p205 = pneg %p36
        %s206 = sand.u32 %s52, 1
        %s207 = scalar_lea.sflag [#allocation6], %s206
        %s208 = sand.u32 %s52, 1
        %s209 = smul.addr %s208, 40
        %s210 = scalar_lea.vmem [#allocation5], %s209
        %p211 = pneg %p65
        %p212 = pneg %p62
        %p213 = pneg %p91
        %p214 = pneg %p88
        %s215 = sand.u32 %s78, 1
        %s216 = scalar_lea.sflag [#allocation4], %s215
        %s217 = sand.u32 %s78, 1
        %s218 = smul.addr %s217, 16
        %s219 = scalar_lea.vmem [#allocation7], %s218
        %p220 = pneg %p112
        %p221 = pneg %p109
        %p222 = pneg %p133
        %p223 = pneg %p130
        %s224 = smul.u32 2, %s23
        %s225 = smul.u32 2, %s23
        %p227 = scmp.eq.s32.totalorder %s23, 0
        // Predicated region
        $region37: #{tpu_custom_call.1} parent=27 // pred_check
          %p228 = pneg %p227
        $region38: #{tpu_custom_call.1} parent=27 // pred_check_branch
          %230 = sbr.rel (%p228) target = $region40
        $region39: #{tpu_custom_call.1} parent=27 // pred_region
          %vm231 = vcmask 7168
          %232 = vst.msk [vmem:[%s3] sm:$0xff] %vm231, 0.0
          %233 = vst.msk [vmem:[%s4] sm:$0xff] %vm231, 0.0
        $region40: #{tpu_custom_call.1} parent=27 // pred_fallthru
          _
        %v234 = vld [vmem:[#allocation2] sm:$0xf]
        %v235 = vld [vmem:[%s199] sm:$0xff]
        %v236 = vld [vmem:[%s199 + $0x8] sm:$0xff]
        %v237 = vld [vmem:[%s199 + $0x10] sm:$0xff]
        %v238 = vld [vmem:[%s199 + $0x18] sm:$0xff]
        %v239 = vld [vmem:[%s199 + $0x20] sm:$0x33]
        %v245 = vunpack.c.l.b16 %v235
        %v246 = vunpack.c.h.b16 %v235
        %v247 = vunpack.c.l.b16 %v236
        %v248 = vunpack.c.h.b16 %v236
        %v249 = vunpack.c.l.b16 %v237
        %v250 = vunpack.c.h.b16 %v237
        %v251 = vunpack.c.l.b16 %v238
        %v252 = vunpack.c.h.b16 %v238
        %v253 = vunpack.c.l.b16 %v239
        %v254 = vunpack.c.h.b16 %v239
        %v255 = vpack.c.b16 %v247, %v245
        %v256 = vpack.c.b16 %v248, %v246
        %v257 = vpack.c.b16 %v251, %v249
        %v258 = vpack.c.b16 %v252, %v250
        %v259 = vpack.c.b16 %v253, %v253
        %v260 = vpack.c.b16 %v254, %v254
        %vm265 = vcmask 293888
        %v267 = vsel %vm265, %v234, 0
        %vm269 = vcmask 1041408
        %v271 = vsel %vm269, %v259, 0
        %v274 = vsel %vm269, %v260, 0
        %276 = vmatprep.subr.bf16.mxu0 0
        %277 = vmatpush1.bf16.msra.mxu0 0
        %278 = vmatprep.subr.bf16.mxu0 0
        %279 = vmatpush1.bf16.msra.mxu0 0
        %280 = vmatprep.subr.bf16.mxu0 0
        %281 = vmatpush1.bf16.msra.mxu0 0
        %282 = vmatprep.subr.bf16.mxu0 0
        %283 = vmatpush1.bf16.msra.mxu0 0
        %284 = vmatprep.subr.bf16.mxu0 0
        %285 = vmatpush1.bf16.msra.mxu0 0
        %286 = vmatprep.subr.bf16.mxu0 %v274
        %287 = vmatpush1.bf16.msra.mxu0 %v271
        %288 = vmatprep.subr.bf16.mxu0 %v258
        %289 = vmatpush1.bf16.msra.mxu0 %v257
        %290 = vmatprep.subr.bf16.mxu0 %v256
        %291 = vmatpush1.bf16.msra.mxu0 %v255
        %292 = vmatprep.subr.bf16.mxu0 0
        %293 = vmatpush2.bf16.msra.mxu0 0
        %294 = vmatprep.subr.bf16.mxu0 0
        %295 = vmatpush2.bf16.msra.mxu0 0
        %296 = vmatprep.subr.bf16.mxu0 0
        %297 = vmatpush2.bf16.msra.mxu0 0
        %298 = vmatprep.subr.bf16.mxu0 0
        %299 = vmatpush2.bf16.msra.mxu0 0
        %300 = vmatprep.subr.bf16.mxu0 0
        %301 = vmatpush2.bf16.msra.mxu0 0
        %302 = vmatprep.subr.bf16.mxu0 0
        %303 = vmatpush2.bf16.msra.mxu0 0
        %304 = vmatprep.subr.bf16.mxu0 0
        %305 = vmatpush2.bf16.msra.mxu0 0
        %306 = vmatprep.subr.bf16.mxu0 0
        %307 = vmatpush2.bf16.msra.mxu0 0
        %308 = vmatprep.mubr.bf16.mxu0 0
        %309 = vmatmul.mubr.bf16.gmra.mxu0 %v267
        %v310 = vpop.f32.mrf.mxu0
        %v311 = vadd.f32 0.0, %v310
        %v312 = vpop.f32.mrf.mxu0
        %v313 = vadd.f32 0.0, %v312
        %v314 = vpop.f32.mrf.mxu0
        %v315 = vpop.f32.mrf.mxu0
        %316 = vdwg.mxu0
        %317 = vst [vmem:[%s219] sm:$0xff] %v311
        %318 = vst [vmem:[%s219 + $0x8] sm:$0xff] %v313
        %v319 = vld [vmem:[%s3] sm:$0xff]
        %v320 = vadd.f32 %v311, %v313
        %321 = vadd.xlane.f32.xlu0 %v320
        %v322 = vpop.xlane.xlu0 %321
        %v323 = vadd.f32 %v319, %v322
        %vm324 = vcmask 7168
        %325 = vst.msk [vmem:[%s3] sm:$0xff] %vm324, %v323
        %v326 = vld [vmem:[%s4] sm:$0xff]
        %v327 = vmul.f32 %v311, %v311
        %v328 = vmul.f32 %v313, %v313
        %v329 = vadd.f32 %v327, %v328
        %330 = vadd.xlane.f32.xlu0 %v329
        %v331 = vpop.xlane.xlu0 %330
        %v332 = vadd.f32 %v326, %v331
        %333 = vst.msk [vmem:[%s4] sm:$0xff] %vm324, %v332
        %s334 = sand.u32 %s78, 1
        %s335 = scalar_lea.sflag [#allocation4], %s334
        %s336 = sand.u32 %s78, 1
        %s337 = smul.addr %s336, 16
        %s338 = scalar_lea.vmem [#allocation7], %s337
        // Predicated region
        $region41: #{tpu_custom_call.1} parent=27 // pred_check
          %p339 = pneg %p88
        $region42: #{tpu_custom_call.1} parent=27 // pred_check_branch
          %341 = sbr.rel (%p339) target = $region44
        $region43: #{tpu_custom_call.1} parent=27 // pred_region
          %s342 = smul.u32 2, %s23
          %s344 = ssub.s32 256, 256
          %345 = vsyncadd %s335, %s344
          %s346 = smul.addr %s342, 128
          %s347 = scalar_lea.hbm %s2, %s346
          %s349 = sshll.u32 %s338, 4
          %s350 = int_to_ptr.vmem [resolvable:$true] %s349
          %352 = dma.vmem_to_hbm [thread:$0]  %s350, 256, %s347, %s335
        $region44: #{tpu_custom_call.1} parent=27 // pred_fallthru
          _
        // Predicated region
        $region45: #{tpu_custom_call.1} parent=27 // pred_check
          %p353 = pneg %p109
        $region46: #{tpu_custom_call.1} parent=27 // pred_check_branch
          %355 = sbr.rel (%p353) target = $region48
        $region47: #{tpu_custom_call.1} parent=27 // pred_region
          _
        $region48: #{tpu_custom_call.1} parent=27 // pred_fallthru
          _
        // Predicated region
        $region49: #{tpu_custom_call.1} parent=27 // pred_check
          %p356 = pneg %p130
        $region50: #{tpu_custom_call.1} parent=27 // pred_check_branch
          %358 = sbr.rel (%p356) target = $region52
        $region51: #{tpu_custom_call.1} parent=27 // pred_region
          _
        $region52: #{tpu_custom_call.1} parent=27 // pred_fallthru
          _
        // Predicated region
        $region53: #{tpu_custom_call.1} parent=27 // pred_check
          %p359 = pneg %p109
        $region54: #{tpu_custom_call.1} parent=27 // pred_check_branch
          %361 = sbr.rel (%p359) target = $region56
        $region55: #{tpu_custom_call.1} parent=27 // pred_region
          _
        $region56: #{tpu_custom_call.1} parent=27 // pred_fallthru
          _
        // Predicated region
        $region57: #{tpu_custom_call.1} parent=27 // pred_check
          %p362 = pneg %p130
        $region58: #{tpu_custom_call.1} parent=27 // pred_check_branch
          %364 = sbr.rel (%p362) target = $region60
        $region59: #{tpu_custom_call.1} parent=27 // pred_region
          _
        $region60: #{tpu_custom_call.1} parent=27 // pred_fallthru
          _
      $region28: #{tpu_custom_call.1} parent=5 // pred_fallthru
        _
      %p365 = scmp.le.s32.totalorder 2, %s18
      // Predicated region
      $region61: #{tpu_custom_call.1} parent=5 // pred_check
        %p366 = pneg %p365
      $region62: #{tpu_custom_call.1} parent=5 // pred_check_branch
        %368 = sbr.rel (%p366) target = $region64
      $region63: #{tpu_custom_call.1} parent=5 // pred_region
        %s369 = ssub.s32 %s18, 2
        // Predicated region
        $region65: #{tpu_custom_call.1} parent=63 // pred_check
          %p370 = pneg %p94
        $region66: #{tpu_custom_call.1} parent=63 // pred_check_branch
          %372 = sbr.rel (%p370) target = $region68
        $region67: #{tpu_custom_call.1} parent=63 // pred_region
          %s373 = sand.u32 %s79, 1
          %s374 = scalar_lea.sflag [#allocation4], %s373
          %s375 = sand.u32 %s79, 1
          %s376 = smul.addr %s375, 16
          %s377 = scalar_lea.vmem [#allocation7], %s376
          %378 = dma.done %s374, 256
        $region68: #{tpu_custom_call.1} parent=63 // pred_fallthru
          _
      $region64: #{tpu_custom_call.1} parent=5 // pred_fallthru
        _
    $region6: #{tpu_custom_call.1} parent=1 // loop_footer
      %s22 = sadd.s32 1, %s18
    $region7: #{tpu_custom_call.1} parent=1 // loop_footer_branch
      %17 = sbr.rel target = $region3
    $region8: #{tpu_custom_call.1} parent=1 // loop_exit
      _
    %379 = vsyncpa [#allocation3], 1
    %s380 = scalar_lea.sflag [#allocation3], 1
    %381 = vsyncpa %s380, 1
    %382 = vsyncpa [#allocation6], 1
    %s383 = scalar_lea.sflag [#allocation6], 1
    %384 = vsyncpa %s383, 1
    %385 = vsyncpa [#allocation4], 1
    %s386 = scalar_lea.sflag [#allocation4], 1
    %387 = vsyncpa %s386, 1

</llo_original>
